<compile_context>
chip_gen: v5e
topology: v5e:2x2
jax: 0.10.0
libtpu: 0.0.40
codegen_flags: <defaults>
</compile_context>

<pallas_src>
import functools

import jax
import jax.numpy as jnp
from jax.experimental import pallas as pl
from jax.experimental.pallas import tpu as pltpu

LANES = 128
SUBLANES = 8
SUB_ROWS = 128   # per-iteration sub-chunk (16 f32 vregs per operand)


def _round_up(x, m):
    return ((x + m - 1) // m) * m


def _row_align(dtype):
    size = jnp.dtype(dtype).itemsize
    if size >= 4:
        return 8
    if size == 2:
        return 16
    return 32


def _chip_config():
    """Return (num_splits, tile_rows, input_buffer_count) for this TPU."""
    num_splits, tile_rows, buffers = 1, 1024, 2   # safe default (v5e-ish)
    try:
        kind = jax.devices()[0].device_kind.lower()
    except Exception:
        return num_splits, tile_rows, buffers
    if "v7" in kind or "tpu7" in kind:
        # 2 TensorCores/chip; big blocks + deeper pipeline to hide step overhead.
        return 2, 4096, 3
    if "v6" in kind:
        return 1, 2048, 2
    return 1, 1024, 2


def _prob_loss_kernel(ps_ref, pt_ref, sum_ref, cnt_ref, *,
                      block_rows, sub_rows, blocks_per_split,
                      total_rows, has_tail):
    i = pl.program_id(1)   # row-block within split (reduction, "arbitrary")

    @pl.when(i == 0)
    def _():
        sum_ref[...] = jnp.zeros_like(sum_ref)
        cnt_ref[...] = jnp.zeros_like(cnt_ref)

    n_sub = block_rows // sub_rows
    folds = sub_rows // SUBLANES

    def _load(k):
        r = pl.multiple_of(k * sub_rows, sub_rows)
        pt = pt_ref[pl.ds(r, sub_rows), :].astype(jnp.float32)
        ps = ps_ref[pl.ds(r, sub_rows), :].astype(jnp.float32)
        return pt, ps

    def _fold(carry, mask, pt, ps):
        s_acc, c_acc = carry
        # Select-based masking: OOB garbage (Inf/NaN) never propagates.
        diff = jnp.where(mask, pt - ps, 0.0)
        sq = diff * diff
        # Layout-preserving fold (sub_rows,128) -> (8,128): pure VPU adds.
        s_acc = s_acc + sq.reshape(folds, SUBLANES, LANES).sum(axis=0)
        c_acc = c_acc + mask.astype(jnp.int32).reshape(
            folds, SUBLANES, LANES).sum(axis=0)
        return s_acc, c_acc

    def hot_body(k, carry):
        pt, ps = _load(k)
        mask = jnp.logical_and(pt > 0.1, pt < 0.9)
        return _fold(carry, mask, pt, ps)

    init = (jnp.zeros((SUBLANES, LANES), jnp.float32),
            jnp.zeros((SUBLANES, LANES), jnp.int32))

    if not has_tail:
        # Compile-time known: every block is fully in-bounds and unique.
        s, cn = jax.lax.fori_loop(0, n_sub, hot_body, init, unroll=True)
        sum_ref[...] += s
        cnt_ref[...] += cn
    else:
        c = pl.program_id(0)
        block_start = (c * blocks_per_split + i) * block_rows
        is_full = block_start + block_rows <= total_rows
        is_active = block_start < total_rows   # False only for clamped duplicate

        def cold_body(k, carry):
            pt, ps = _load(k)
            row_ids = (block_start + k * sub_rows
                       + jax.lax.broadcasted_iota(jnp.int32, (sub_rows, LANES), 0))
            in_bounds = row_ids < total_rows
            mask = jnp.logical_and(jnp.logical_and(pt > 0.1, pt < 0.9), in_bounds)
            return _fold(carry, mask, pt, ps)

        @pl.when(is_full)
        def _():
            s, cn = jax.lax.fori_loop(0, n_sub, hot_body, init, unroll=True)
            sum_ref[...] += s
            cnt_ref[...] += cn

        @pl.when(jnp.logical_and(is_active, jnp.logical_not(is_full)))
        def _():
            s, cn = jax.lax.fori_loop(0, n_sub, cold_body, init, unroll=True)
            sum_ref[...] += s
            cnt_ref[...] += cn


def _make_in_spec(block_rows, index_map, buffer_count):
    if buffer_count != 2:
        try:
            return pl.BlockSpec((block_rows, LANES), index_map,
                                pipeline_mode=pl.Buffered(buffer_count))
        except (TypeError, AttributeError):
            pass   # fall back to default double-buffering
    return pl.BlockSpec((block_rows, LANES), index_map)


def prob_loss(p_s, p_t):
    """Pallas implementation of ProbLoss.forward(p_s, p_t)."""
    num_splits, tile_rows, buffer_count = _chip_config()

    flat_s = p_s.reshape(-1)
    flat_t = p_t.reshape(-1)
    n = flat_s.shape[0]

    # Row alignment follows the sublane packing of the (possibly sub-32-bit)
    # input dtype; no host-side upcast (kernel upcasts in-register).
    row_align = max(_row_align(flat_s.dtype), _row_align(flat_t.dtype))
    chunk = row_align * LANES
    rem = n % chunk
    if rem:
        # Padded p_t = 0 fails (p_t > 0.1), so padding never contributes.
        pad = chunk - rem
        flat_s = jnp.pad(flat_s, (0, pad))
        flat_t = jnp.pad(flat_t, (0, pad))
    rows = flat_s.shape[0] // LANES
    xs = flat_s.reshape(rows, LANES)
    xt = flat_t.reshape(rows, LANES)

    per_split_rows = pl.cdiv(rows, num_splits)
    block_rows = min(tile_rows, _round_up(per_split_rows, row_align))
    sub_rows = min(SUB_ROWS, block_rows)
    if block_rows % sub_rows:
        block_rows = _round_up(block_rows, sub_rows)

    blocks_total = pl.cdiv(rows, block_rows)
    blocks_per_split = pl.cdiv(blocks_total, num_splits)
    grid = (num_splits, blocks_per_split)

    need_clamp = num_splits * blocks_per_split > blocks_total
    has_tail = need_clamp or (rows % block_rows != 0)

    if need_clamp:
        # Short split re-reads the last block; its contribution is skipped
        # in-kernel (is_active is False for the duplicated block).
        def in_map(c, i):
            return (jnp.minimum(c * blocks_per_split + i, blocks_total - 1), 0)
    else:
        def in_map(c, i):
            return (c * blocks_per_split + i, 0)

    kernel = functools.partial(
        _prob_loss_kernel,
        block_rows=block_rows,
        sub_rows=sub_rows,
        blocks_per_split=blocks_per_split,
        total_rows=rows,
        has_tail=has_tail,
    )

    in_spec = _make_in_spec(block_rows, in_map, buffer_count)

    # TODO(synk): verify in the trace that the leading "parallel" axis really
    # shards across both v7x TensorCores; if not, switch it to
    # pltpu.CORE_PARALLEL.
    sum_parts, cnt_parts = pl.pallas_call(
        kernel,
        out_shape=(
            jax.ShapeDtypeStruct((num_splits, SUBLANES, LANES), jnp.float32),
            jax.ShapeDtypeStruct((num_splits, SUBLANES, LANES), jnp.int32),
        ),
        grid_spec=pltpu.PrefetchScalarGridSpec(
            num_scalar_prefetch=0,
            grid=grid,
            in_specs=[in_spec, in_spec],
            out_specs=[
                pl.BlockSpec((None, SUBLANES, LANES), lambda c, i: (c, 0, 0)),
                pl.BlockSpec((None, SUBLANES, LANES), lambda c, i: (c, 0, 0)),
            ],
        ),
        compiler_params=pltpu.CompilerParams(
            dimension_semantics=("parallel", "arbitrary"),
        ),
    )(xs, xt)

    total_sq = jnp.sum(sum_parts)
    n_pos = jnp.maximum(jnp.float32(1.0), jnp.sum(cnt_parts).astype(jnp.float32))
    return total_sq / n_pos


def prob_loss_ref(p_s, p_t):
    """Pure-JAX reference mirroring the PyTorch module (f32 math)."""
    p_s = p_s.astype(jnp.float32)
    p_t = p_t.astype(jnp.float32)
    mask = jnp.logical_and(p_t > 0.1, p_t < 0.9)
    n_pos = jnp.maximum(1.0, jnp.sum(mask.astype(jnp.float32)))
    diff = jnp.where(mask, p_t - p_s, 0.0)
    return jnp.sum(diff * diff) / n_pos


if __name__ == "__main__":
    key = jax.random.PRNGKey(0)
    k1, k2, k3, k4, k5, k6 = jax.random.split(key, 6)

    # Primary: small NCHW shape consistent with the module.
    shape = (2, 4, 16, 16)
    p_s = jax.random.uniform(k1, shape, dtype=jnp.float32)
    p_t = jax.random.uniform(k2, shape, dtype=jnp.float32)
    out = jax.block_until_ready(prob_loss(p_s, p_t))
    ref = jax.block_until_ready(prob_loss_ref(p_s, p_t))
    assert jnp.allclose(out, ref, rtol=1e-5, atol=1e-6), (out, ref)

    # Irregular numel: exercises the pad + tail/duplicate-block (cold) path.
    shape2 = (2, 3, 5, 7)
    q_s = jax.random.uniform(k3, shape2, dtype=jnp.float32)
    q_t = jax.random.uniform(k4, shape2, dtype=jnp.float32)
    out2 = jax.block_until_ready(prob_loss(q_s, q_t))
    ref2 = jax.block_until_ready(prob_loss_ref(q_s, q_t))
    assert jnp.allclose(out2, ref2, rtol=1e-5, atol=1e-6), (out2, ref2)

    # bf16 inputs taken directly (no host upcast); kernel upcasts in-register.
    r_s = jax.random.uniform(k5, shape, dtype=jnp.bfloat16)
    r_t = jax.random.uniform(k6, shape, dtype=jnp.bfloat16)
    out3 = jax.block_until_ready(prob_loss(r_s, r_t))
    ref3 = jax.block_until_ready(prob_loss_ref(r_s, r_t))
    assert jnp.allclose(out3, ref3, rtol=1e-5, atol=1e-6), (out3, ref3)

    print("KERNEL_OK")
</pallas_src>

<mosaic_0001>
module attributes {stable_mosaic.version = 11 : i64} {
  func.func @_prob_loss_kernel(%arg0: i32, %arg1: i32, %arg2: memref<16x128xf32, #tpu.memory_space<vmem>>, %arg3: memref<16x128xf32, #tpu.memory_space<vmem>>, %arg4: memref<1x8x128xf32, #tpu.memory_space<vmem>>, %arg5: memref<1x8x128xi32, #tpu.memory_space<vmem>>) attributes {dimension_semantics = [#tpu.dimension_semantics<parallel>, #tpu.dimension_semantics<arbitrary>], iteration_bounds = array<i64: 1, 1>, scalar_prefetch = 0 : i64, scratch_operands = 0 : i64, tpu.core_type = #tpu.core_type<tc>, window_params = [{transform_indices = @transform_0, window_bounds = array<i64: 16, 128>}, {transform_indices = @transform_1, window_bounds = array<i64: 16, 128>}, {transform_indices = @transform_2, window_bounds = array<i64: 1, 8, 128>}, {transform_indices = @transform_3, window_bounds = array<i64: 1, 8, 128>}]} {
    %c0_i32 = arith.constant 0 : i32
    %0 = arith.cmpi eq, %arg1, %c0_i32 : i32
    %1 = arith.extui %0 : i1 to i32
    %c0_i32_0 = arith.constant 0 : i32
    %2 = arith.cmpi ne, %1, %c0_i32_0 : i32
    scf.if %2 {
      %cst_21 = arith.constant 0.000000e+00 : f32
      %39 = vector.broadcast %cst_21 : f32 to vector<8x128xf32>
      %c0_22 = arith.constant 0 : index
      %c0_23 = arith.constant 0 : index
      %c0_24 = arith.constant 0 : index
      %40 = vector.load %arg4[%c0_22, %c0_23, %c0_24] : memref<1x8x128xf32, #tpu.memory_space<vmem>>, vector<1x8x128xf32>
      %41 = vector.shape_cast %40 : vector<1x8x128xf32> to vector<8x128xf32>
      %42 = vector.shape_cast %39 : vector<8x128xf32> to vector<1x8x128xf32>
      tpu.vector_store %arg4[%c0_22, %c0_23, %c0_24], %42 {strides = array<i32>} : memref<1x8x128xf32, #tpu.memory_space<vmem>>, vector<1x8x128xf32>,
      %c0_i32_25 = arith.constant 0 : i32
      %43 = vector.broadcast %c0_i32_25 : i32 to vector<8x128xi32>
      %c0_26 = arith.constant 0 : index
      %c0_27 = arith.constant 0 : index
      %c0_28 = arith.constant 0 : index
      %44 = vector.load %arg5[%c0_26, %c0_27, %c0_28] : memref<1x8x128xi32, #tpu.memory_space<vmem>>, vector<1x8x128xi32>
      %45 = vector.shape_cast %44 : vector<1x8x128xi32> to vector<8x128xi32>
      %46 = vector.shape_cast %43 : vector<8x128xi32> to vector<1x8x128xi32>
      tpu.vector_store %arg5[%c0_26, %c0_27, %c0_28], %46 {strides = array<i32>} : memref<1x8x128xi32, #tpu.memory_space<vmem>>, vector<1x8x128xi32>,
    } else {
    }
    %cst = arith.constant 0.000000e+00 : f32
    %3 = vector.broadcast %cst : f32 to vector<8x128xf32>
    %c0_i32_1 = arith.constant 0 : i32
    %4 = vector.broadcast %c0_i32_1 : i32 to vector<8x128xi32>
    %c0_i32_2 = arith.constant 0 : i32
    %c16_i32 = arith.constant 16 : i32
    %5 = arith.muli %c0_i32_2, %c16_i32 : i32
    %6 = tpu.assume_multiple %5, 16 : i32
    %7 = arith.index_cast %6 : i32 to index
    %c0 = arith.constant 0 : index
    %8 = vector.load %arg3[%7, %c0] : memref<16x128xf32, #tpu.memory_space<vmem>>, vector<16x128xf32>
    %9 = arith.index_cast %6 : i32 to index
    %c0_3 = arith.constant 0 : index
    %10 = vector.load %arg2[%9, %c0_3] : memref<16x128xf32, #tpu.memory_space<vmem>>, vector<16x128xf32>
    %cst_4 = arith.constant 1.000000e-01 : f32
    %11 = vector.broadcast %cst_4 : f32 to vector<16x128xf32>
    %12 = arith.cmpf ogt, %8, %11 : vector<16x128xf32>
    %cst_5 = arith.constant 0.899999976 : f32
    %13 = vector.broadcast %cst_5 : f32 to vector<16x128xf32>
    %14 = arith.cmpf olt, %8, %13 : vector<16x128xf32>
    %15 = arith.andi %12, %14 : vector<16x128xi1>
    %16 = arith.subf %8, %10 : vector<16x128xf32>
    %cst_6 = arith.constant 0.000000e+00 : f32
    %17 = vector.broadcast %cst_6 : f32 to vector<16x128xf32>
    %18 = arith.select %15, %16, %17 : vector<16x128xi1>, vector<16x128xf32>
    %19 = arith.mulf %18, %18 : vector<16x128xf32>
    %20 = vector.shape_cast %19 : vector<16x128xf32> to vector<2x8x128xf32>
    %cst_7 = arith.constant dense<0.000000e+00> : vector<8x128xf32>
    %21 = vector.multi_reduction <add>, %20, %cst_7 [0] : vector<2x8x128xf32> to vector<8x128xf32>
    %22 = arith.addf %3, %21 : vector<8x128xf32>
    %23 = arith.extui %15 : vector<16x128xi1> to vector<16x128xi32>
    %24 = vector.shape_cast %23 : vector<16x128xi32> to vector<2x8x128xi32>
    %cst_8 = arith.constant dense<0> : vector<8x128xi32>
    %25 = vector.multi_reduction <add>, %24, %cst_8 [0] : vector<2x8x128xi32> to vector<8x128xi32>
    %26 = arith.addi %4, %25 : vector<8x128xi32>
    %c1_i32 = arith.constant 1 : i32
    %c0_9 = arith.constant 0 : index
    %c0_10 = arith.constant 0 : index
    %c0_11 = arith.constant 0 : index
    %27 = vector.load %arg4[%c0_9, %c0_10, %c0_11] : memref<1x8x128xf32, #tpu.memory_space<vmem>>, vector<1x8x128xf32>
    %28 = vector.shape_cast %27 : vector<1x8x128xf32> to vector<8x128xf32>
    %29 = arith.addf %28, %22 : vector<8x128xf32>
    %c0_12 = arith.constant 0 : index
    %c0_13 = arith.constant 0 : index
    %c0_14 = arith.constant 0 : index
    %30 = vector.load %arg4[%c0_12, %c0_13, %c0_14] : memref<1x8x128xf32, #tpu.memory_space<vmem>>, vector<1x8x128xf32>
    %31 = vector.shape_cast %30 : vector<1x8x128xf32> to vector<8x128xf32>
    %32 = vector.shape_cast %29 : vector<8x128xf32> to vector<1x8x128xf32>
    tpu.vector_store %arg4[%c0_12, %c0_13, %c0_14], %32 {strides = array<i32>} : memref<1x8x128xf32, #tpu.memory_space<vmem>>, vector<1x8x128xf32>,
    %c0_15 = arith.constant 0 : index
    %c0_16 = arith.constant 0 : index
    %c0_17 = arith.constant 0 : index
    %33 = vector.load %arg5[%c0_15, %c0_16, %c0_17] : memref<1x8x128xi32, #tpu.memory_space<vmem>>, vector<1x8x128xi32>
    %34 = vector.shape_cast %33 : vector<1x8x128xi32> to vector<8x128xi32>
    %35 = arith.addi %34, %26 : vector<8x128xi32>
    %c0_18 = arith.constant 0 : index
    %c0_19 = arith.constant 0 : index
    %c0_20 = arith.constant 0 : index
    %36 = vector.load %arg5[%c0_18, %c0_19, %c0_20] : memref<1x8x128xi32, #tpu.memory_space<vmem>>, vector<1x8x128xi32>
    %37 = vector.shape_cast %36 : vector<1x8x128xi32> to vector<8x128xi32>
    %38 = vector.shape_cast %35 : vector<8x128xi32> to vector<1x8x128xi32>
    tpu.vector_store %arg5[%c0_18, %c0_19, %c0_20], %38 {strides = array<i32>} : memref<1x8x128xi32, #tpu.memory_space<vmem>>, vector<1x8x128xi32>,
    return
  }
  func.func @transform_0(%arg0: i32, %arg1: i32) -> (i32, i32) {
    %c1_i32 = arith.constant 1 : i32
    %0 = arith.muli %arg0, %c1_i32 : i32
    %1 = arith.addi %0, %arg1 : i32
    %c0_i32 = arith.constant 0 : i32
    %c0_i32_0 = arith.constant 0 : i32
    return %1, %c0_i32 : i32, i32
  }
  func.func @transform_1(%arg0: i32, %arg1: i32) -> (i32, i32) {
    %c1_i32 = arith.constant 1 : i32
    %0 = arith.muli %arg0, %c1_i32 : i32
    %1 = arith.addi %0, %arg1 : i32
    %c0_i32 = arith.constant 0 : i32
    %c0_i32_0 = arith.constant 0 : i32
    return %1, %c0_i32 : i32, i32
  }
  func.func @transform_2(%arg0: i32, %arg1: i32) -> (i32, i32, i32) {
    %c0_i32 = arith.constant 0 : i32
    %c0_i32_0 = arith.constant 0 : i32
    %c0_i32_1 = arith.constant 0 : i32
    return %arg0, %c0_i32, %c0_i32_0 : i32, i32, i32
  }
  func.func @transform_3(%arg0: i32, %arg1: i32) -> (i32, i32, i32) {
    %c0_i32 = arith.constant 0 : i32
    %c0_i32_0 = arith.constant 0 : i32
    %c0_i32_1 = arith.constant 0 : i32
    return %arg0, %c0_i32, %c0_i32_0 : i32, i32, i32
  }
}

</mosaic_0001>

<llo_original>
// kernel: tpu_custom_call.1
$region0: #{tpu_custom_call.1}
  #allocation0 [shape = 'u32[]', space=smem, size = 0x4, offset = 0x4, fixed_abs, tag = 'smem constant byte address 0x4 - core index']
  #allocation1 [shape = 'u32[72,128]{1,0:T(1,128)}', space=vmem, size = 0x9000, scoped, tag = 'internal scratch']
  %s0 = inlined_call_operand.hbm [shape: f32[16,128], index: 0, kind: input, shape index: {}]
  %s1 = inlined_call_operand.hbm [shape: f32[16,128], index: 1, kind: input, shape index: {}]
  %s2 = inlined_call_operand.hbm [shape: f32[1,8,128], index: 2, kind: output, shape index: {0}]
  %s3 = inlined_call_operand.hbm [shape: s32[1,8,128], index: 3, kind: output, shape index: {1}]
  %4 = xla_tuple %s2, %s3
  %s5 = sld [smem:[#allocation0]]
  $region38: #{tpu_custom_call.1} parent=0
    _
  %s7 = ssub.s32 1, %s5
  %s8 = scalar_select 0, %s7, %s5
  $region1: #{tpu_custom_call.1} parent=0
    #allocation2 [shape = 'u8[8192]{0}', space=vmem, size = 0x2000, scoped, tag = 'input window, operand 0, single buffered']
    #allocation3 [shape = 's32[1]{0}', space=sflag, size = 0x4, scoped, tag = 'scoped memory for tpu_custom_call.1']
    #allocation4 [shape = 's32[1]{0}', space=sflag, size = 0x4, scoped, tag = 'scoped memory for tpu_custom_call.1']
    #allocation5 [shape = 'u8[8192]{0}', space=vmem, size = 0x2000, scoped, tag = 'input window, operand 1, single buffered']
    #allocation6 [shape = 's32[1]{0}', space=sflag, size = 0x4, scoped, tag = 'scoped memory for tpu_custom_call.1']
    #allocation7 [shape = 'u8[4096]{0}', space=vmem, size = 0x1000, scoped, tag = 'output window, operand 0, single buffered']
    #allocation8 [shape = 'u8[4096]{0}', space=vmem, size = 0x1000, scoped, tag = 'output window, operand 1, single buffered']
    #allocation9 [shape = 's32[1]{0}', space=sflag, size = 0x4, scoped, tag = 'scoped memory for tpu_custom_call.1']
    %9 = vsyncpa [#allocation3], 0
    %10 = vsyncpa [#allocation6], 0
    %11 = vsyncpa [#allocation4], 0
    %12 = vsyncpa [#allocation9], 0
    // Predicated region
    $region2: #{tpu_custom_call.1} parent=1 // pred_check
      _
    $region3: #{tpu_custom_call.1} parent=1 // pred_check_branch
      %14 = sbr.rel (0) target = $region5
    $region4: #{tpu_custom_call.1} parent=1 // pred_region
      %s15 = sadd.s32 0, 0
      %s16 = smul.u32 2, %s15
      %18 = vsyncadd [#allocation3], 0
      %s19 = smul.addr %s16, 8
      %s20 = scalar_lea.hbm %s0, %s19
      %s21 = sshll.u32 %s20, 4
      %s22 = int_to_ptr.hbm [resolvable:$true] %s21
      %s23 = sshll.u32 [#allocation2], 4
      %s24 = int_to_ptr.vmem [resolvable:$true] %s23
      %29 = dma.hbm_to_vmem [thread:$0]  %s22, 256, %s24, [#allocation3], 128, 128, 8
    $region5: #{tpu_custom_call.1} parent=1 // pred_fallthru
      _
    // Predicated region
    $region6: #{tpu_custom_call.1} parent=1 // pred_check
      _
    $region7: #{tpu_custom_call.1} parent=1 // pred_check_branch
      %31 = sbr.rel (0) target = $region9
    $region8: #{tpu_custom_call.1} parent=1 // pred_region
      %s32 = sadd.s32 0, 0
      %s33 = smul.u32 2, %s32
      %35 = vsyncadd [#allocation6], 0
      %s36 = smul.addr %s33, 8
      %s37 = scalar_lea.hbm %s1, %s36
      %s38 = sshll.u32 %s37, 4
      %s39 = int_to_ptr.hbm [resolvable:$true] %s38
      %s40 = sshll.u32 [#allocation5], 4
      %s41 = int_to_ptr.vmem [resolvable:$true] %s40
      %46 = dma.hbm_to_vmem [thread:$0]  %s39, 256, %s41, [#allocation6], 128, 128, 8
    $region9: #{tpu_custom_call.1} parent=1 // pred_fallthru
      _
    // Predicated region
    $region10: #{tpu_custom_call.1} parent=1 // pred_check
      _
    $region11: #{tpu_custom_call.1} parent=1 // pred_check_branch
      %48 = sbr.rel (0) target = $region13
    $region12: #{tpu_custom_call.1} parent=1 // pred_region
      %50 = dma.done [#allocation3], 256
    $region13: #{tpu_custom_call.1} parent=1 // pred_fallthru
      _
    // Predicated region
    $region14: #{tpu_custom_call.1} parent=1 // pred_check
      _
    $region15: #{tpu_custom_call.1} parent=1 // pred_check_branch
      %52 = sbr.rel (0) target = $region17
    $region16: #{tpu_custom_call.1} parent=1 // pred_region
      %54 = dma.done [#allocation6], 256
    $region17: #{tpu_custom_call.1} parent=1 // pred_fallthru
      _
    %s55 = sadd.s32 0, 0
    %s56 = smul.u32 2, %s55
    %s57 = sadd.s32 0, 0
    %s58 = smul.u32 2, %s57
    %p59 = scmp.eq.s32.totalorder 0, 0
    // Predicated region
    $region18: #{tpu_custom_call.1} parent=1 // pred_check
      %p60 = pneg %p59
    $region19: #{tpu_custom_call.1} parent=1 // pred_check_branch
      %62 = sbr.rel (%p60) target = $region21
    $region20: #{tpu_custom_call.1} parent=1 // pred_region
      %63 = vst [vmem:[#allocation7] sm:$0xff] 0.0
      %64 = vst [vmem:[#allocation8] sm:$0xff] 0
    $region21: #{tpu_custom_call.1} parent=1 // pred_fallthru
      _
    %v65 = vld [vmem:[#allocation5] sm:$0xff]
    %v66 = vld [vmem:[#allocation5 + $0x8] sm:$0xff]
    %v67 = vld [vmem:[#allocation2] sm:$0xff]
    %v68 = vld [vmem:[#allocation2 + $0x8] sm:$0xff]
    %vm69 = vcmp.gt.f32.partialorder %v65, 0.1
    %vm70 = vcmp.gt.f32.partialorder %v66, 0.1
    %vm71 = vcmp.lt.f32.partialorder %v65, 0.9
    %vm72 = vcmp.lt.f32.partialorder %v66, 0.9
    %vm73 = vmand %vm69, %vm71
    %vm74 = vmand %vm70, %vm72
    %v75 = vsub.f32 %v65, %v67
    %v76 = vsub.f32 %v66, %v68
    %v77 = vsel %vm73, %v75, 0.0
    %v78 = vsel %vm74, %v76, 0.0
    %v79 = vmul.f32 %v77, %v77
    %v80 = vmul.f32 %v78, %v78
    %v81 = vadd.f32 %v79, %v80
    %v82 = vadd.f32 %v81, 0.0
    %v83 = vsel %vm73, 1, 0
    %v84 = vsel %vm74, 1, 0
    %v85 = vadd.s32 %v83, %v84
    %v86 = vld [vmem:[#allocation7] sm:$0xff]
    %v87 = vadd.f32 %v86, %v82
    %88 = vst [vmem:[#allocation7] sm:$0xff] %v87
    %v89 = vld [vmem:[#allocation8] sm:$0xff]
    %v90 = vadd.s32 %v89, %v85
    %91 = vst [vmem:[#allocation8] sm:$0xff] %v90
    // Predicated region
    $region22: #{tpu_custom_call.1} parent=1 // pred_check
      _
    $region23: #{tpu_custom_call.1} parent=1 // pred_check_branch
      %93 = sbr.rel (0) target = $region25
    $region24: #{tpu_custom_call.1} parent=1 // pred_region
      %95 = vsyncadd [#allocation4], 0
      %s97 = sshll.u32 [#allocation7], 4
      %s98 = int_to_ptr.vmem [resolvable:$true] %s97
      %s99 = sshll.u32 %s2, 4
      %s100 = int_to_ptr.hbm [resolvable:$true] %s99
      %102 = dma.vmem_to_hbm [thread:$0]  %s98, 128, %s100, [#allocation4]
    $region25: #{tpu_custom_call.1} parent=1 // pred_fallthru
      _
    // Predicated region
    $region26: #{tpu_custom_call.1} parent=1 // pred_check
      _
    $region27: #{tpu_custom_call.1} parent=1 // pred_check_branch
      %104 = sbr.rel (0) target = $region29
    $region28: #{tpu_custom_call.1} parent=1 // pred_region
      %106 = vsyncadd [#allocation9], 0
      %s108 = sshll.u32 [#allocation8], 4
      %s109 = int_to_ptr.vmem [resolvable:$true] %s108
      %s110 = sshll.u32 %s3, 4
      %s111 = int_to_ptr.hbm [resolvable:$true] %s110
      %113 = dma.vmem_to_hbm [thread:$0]  %s109, 128, %s111, [#allocation9]
    $region29: #{tpu_custom_call.1} parent=1 // pred_fallthru
      _
    // Predicated region
    $region30: #{tpu_custom_call.1} parent=1 // pred_check
      _
    $region31: #{tpu_custom_call.1} parent=1 // pred_check_branch
      %115 = sbr.rel (0) target = $region33
    $region32: #{tpu_custom_call.1} parent=1 // pred_region
      %117 = dma.done [#allocation4], 128
    $region33: #{tpu_custom_call.1} parent=1 // pred_fallthru
      _
    // Predicated region
    $region34: #{tpu_custom_call.1} parent=1 // pred_check
      _
    $region35: #{tpu_custom_call.1} parent=1 // pred_check_branch
      %119 = sbr.rel (0) target = $region37
    $region36: #{tpu_custom_call.1} parent=1 // pred_region
      %121 = dma.done [#allocation9], 128
    $region37: #{tpu_custom_call.1} parent=1 // pred_fallthru
      _
    %122 = vsyncpa [#allocation3], 1
    %123 = vsyncpa [#allocation6], 1
    %124 = vsyncpa [#allocation4], 1
    %125 = vsyncpa [#allocation9], 1

</llo_original>
